<compile_context>
chip_gen: v5e
topology: v5e:2x2
jax: 0.10.0
libtpu: 0.0.40
codegen_flags: <defaults>
</compile_context>

<pallas_src>
import math

import jax
import jax.numpy as jnp
from jax.experimental import pallas as pl
from jax.experimental.pallas import tpu as pltpu


def _ilayer_kernel(x_ref, w_ref, o_ref):
    # x_ref: (tile_b, tile_n), w_ref: (1, tile_n) -> broadcast multiply on VPU.
    o_ref[...] = x_ref[...] * w_ref[...]


def _round_up(x, m):
    return (x + m - 1) // m * m


def _vmem_capacity_bytes():
    try:
        return int(pltpu.get_tpu_info().vmem_capacity_bytes)
    except Exception:
        return 0


def _generation_budgets():
    """Return (vmem_limit_bytes, target_x_block_bytes) for this TPU."""
    cap = _vmem_capacity_bytes()
    if cap <= 0:
        # Unknown chip: stay safely under the 16 MiB v5e scoped default.
        return 14 << 20, 1 << 20
    if cap <= (64 << 20):
        # v7x: 64 MiB VMEM per TensorCore, 3.2 TB/s HBM -> wants big tiles.
        return 40 << 20, 4 << 20
    # v5e / v6e: 128 MiB physical VMEM.
    return 64 << 20, 4 << 20


def _sublane_multiple(dtype):
    bits = jnp.dtype(dtype).itemsize * 8
    if bits >= 32:
        return 8
    if bits == 16:
        return 16
    return 32


def _choose_tiles(b, n, dtype, target_block_bytes, tile_budget_bytes):
    """Pick (tile_b, tile_n): lane-dense, ~target-sized x blocks, VMEM-safe."""
    itemsize = jnp.dtype(dtype).itemsize
    sub = _sublane_multiple(dtype)

    # Cap the x block so the double-buffered working set (x, out, weight row)
    # stays comfortably inside the requested VMEM limit.
    block_cap = max(128 * sub * itemsize,
                    min(target_block_bytes, tile_budget_bytes // 6))

    # Lane tile: large multiple of 128 (itemsize-aware, ~64 KiB per sublane row).
    lane_cap = max(128, (65536 // itemsize) // 128 * 128)
    tile_n = min(_round_up(n, 128), lane_cap)
    max_tn = max(128, (block_cap // (itemsize * max(1, min(b, sub)))) // 128 * 128)
    tile_n = min(tile_n, max_tn)

    # Batch (sublane) tile: fill the block up to block_cap; never overshoot
    # round_up(b, sub); either equal to the full batch dim or a multiple of the
    # packed sublane count so the (sub, 128) min-tile constraint always holds.
    rows = max(1, block_cap // (tile_n * itemsize))
    if rows >= b or b <= sub:
        tile_b = b
    else:
        tile_b = min(max(sub, (rows // sub) * sub), _round_up(b, sub))
        if tile_b >= b:
            tile_b = b
    return tile_b, tile_n


def _ilayer_pallas(x2, w2, tile_b, tile_n, vmem_limit_bytes):
    """x2: (B, N), w2: (1, N). Boundary blocks are masked by Pallas."""
    b, n = x2.shape
    itemsize = jnp.dtype(x2.dtype).itemsize
    grid = (pl.cdiv(n, tile_n), pl.cdiv(b, tile_b))  # chw-tile outer, batch inner
    return pl.pallas_call(
        _ilayer_kernel,
        out_shape=jax.ShapeDtypeStruct((b, n), x2.dtype),
        grid_spec=pltpu.PrefetchScalarGridSpec(
            num_scalar_prefetch=0,
            grid=grid,
            in_specs=[
                # x: distinct block per (chw tile, batch tile).
                pl.BlockSpec((tile_b, tile_n), lambda t, bi: (bi, t)),
                # weights: depend only on the chw tile -> DMA'd once per tile,
                # VMEM-resident across the inner batch loop.
                pl.BlockSpec((1, tile_n), lambda t, bi: (0, t)),
            ],
            out_specs=pl.BlockSpec((tile_b, tile_n), lambda t, bi: (bi, t)),
        ),
        compiler_params=pltpu.CompilerParams(
            # Pure elementwise map, no carry: both axes may shard across the
            # two v7x TensorCores (no effect on single-TC v5e/v6e).
            dimension_semantics=("parallel", "parallel"),
            vmem_limit_bytes=vmem_limit_bytes,
        ),
        cost_estimate=pl.CostEstimate(
            flops=b * n,
            transcendentals=0,
            bytes_accessed=(2 * b * n + n) * itemsize,
        ),
    )(x2, w2)


def ilayer_forward(x, weights, *, force_pallas=False,
                   min_bytes_for_pallas=4 << 20,
                   tile_b=None, tile_n=None):
    """x: (B, C, H, W), weights: (C, H, W) -> x * weights (broadcast over B)."""
    assert x.shape[1:] == weights.shape
    b = x.shape[0]
    n = math.prod(weights.shape)
    itemsize = jnp.dtype(x.dtype).itemsize

    # A standalone broadcast multiply is already at the HBM roofline under XLA
    # fusion; only take the Pallas path for large tensors (or when forced,
    # e.g. when it is being fused with adjacent Pallas work).
    if not force_pallas and b * n * itemsize < min_bytes_for_pallas:
        return x * weights[None]

    vmem_limit_bytes, target_block_bytes = _generation_budgets()
    auto_tb, auto_tn = _choose_tiles(
        b, n, x.dtype, target_block_bytes,
        max(4 << 20, vmem_limit_bytes - (2 << 20)))
    tile_b = auto_tb if tile_b is None else tile_b
    tile_n = auto_tn if tile_n is None else tile_n

    # No wrapper-side padding or output slicing: reshape is layout-free and the
    # cdiv grid + Pallas boundary-block masking handle non-multiple N / B, so x
    # makes exactly one HBM round trip.
    x2 = x.reshape(b, n)
    w2 = weights.reshape(1, n)
    out2 = _ilayer_pallas(x2, w2, tile_b, tile_n, vmem_limit_bytes)
    return out2.reshape(x.shape)


if __name__ == "__main__":
    key = jax.random.PRNGKey(0)
    k1, k2, k3, k4, k5, k6 = jax.random.split(key, 6)

    # Case 1: small, lane-aligned shape (C*H*W = 1024).
    B, C, H, W = 2, 4, 16, 16
    x = jax.random.normal(k1, (B, C, H, W), dtype=jnp.float32)
    w = jax.random.normal(k2, (C, H, W), dtype=jnp.float32)  # torch.randn analogue
    out = ilayer_forward(x, w, force_pallas=True)
    jax.block_until_ready(out)
    assert out.shape == x.shape
    assert jnp.allclose(out, x * w[None], atol=1e-6, rtol=1e-6)

    # Case 2: non-128-multiple C*H*W (= 210) -> masked boundary block on lanes.
    B2, C2, H2, W2 = 3, 3, 10, 7
    x_b = jax.random.normal(k3, (B2, C2, H2, W2), dtype=jnp.float32)
    w_b = jax.random.normal(k4, (C2, H2, W2), dtype=jnp.float32)
    out_b = ilayer_forward(x_b, w_b, force_pallas=True)
    jax.block_until_ready(out_b)
    assert out_b.shape == x_b.shape
    assert jnp.allclose(out_b, x_b * w_b[None], atol=1e-6, rtol=1e-6)

    # Case 3: forced small tiles -> multi-step grid with masked boundary blocks
    # in both the lane and the batch dimensions (N=780, B=10).
    B3, C3, H3, W3 = 10, 3, 20, 13
    x_c = jax.random.normal(k5, (B3, C3, H3, W3), dtype=jnp.float32)
    w_c = jax.random.normal(k6, (C3, H3, W3), dtype=jnp.float32)
    out_c = ilayer_forward(x_c, w_c, force_pallas=True, tile_b=8, tile_n=256)
    jax.block_until_ready(out_c)
    assert out_c.shape == x_c.shape
    assert jnp.allclose(out_c, x_c * w_c[None], atol=1e-6, rtol=1e-6)

    print("KERNEL_OK")
</pallas_src>

<mosaic_0001>
module attributes {stable_mosaic.version = 11 : i64} {
  func.func @_ilayer_kernel(%arg0: i32, %arg1: i32, %arg2: memref<2x1024xf32, #tpu.memory_space<vmem>>, %arg3: memref<1x1024xf32, #tpu.memory_space<vmem>>, %arg4: memref<2x1024xf32, #tpu.memory_space<vmem>>) attributes {dimension_semantics = [#tpu.dimension_semantics<parallel>, #tpu.dimension_semantics<parallel>], iteration_bounds = array<i64: 1, 1>, scalar_prefetch = 0 : i64, scratch_operands = 0 : i64, tpu.core_type = #tpu.core_type<tc>, window_params = [{transform_indices = @transform_0, window_bounds = array<i64: 2, 1024>}, {transform_indices = @transform_1, window_bounds = array<i64: 1, 1024>}, {transform_indices = @transform_2, window_bounds = array<i64: 2, 1024>}]} {
    %c0 = arith.constant 0 : index
    %c0_0 = arith.constant 0 : index
    %0 = vector.load %arg2[%c0, %c0_0] : memref<2x1024xf32, #tpu.memory_space<vmem>>, vector<2x1024xf32>
    %c0_1 = arith.constant 0 : index
    %c0_2 = arith.constant 0 : index
    %1 = vector.load %arg3[%c0_1, %c0_2] : memref<1x1024xf32, #tpu.memory_space<vmem>>, vector<1x1024xf32>
    %2 = vector.broadcast %1 : vector<1x1024xf32> to vector<2x1024xf32>
    %3 = arith.mulf %0, %2 : vector<2x1024xf32>
    %c0_3 = arith.constant 0 : index
    %c0_4 = arith.constant 0 : index
    %4 = vector.load %arg4[%c0_3, %c0_4] : memref<2x1024xf32, #tpu.memory_space<vmem>>, vector<2x1024xf32>
    tpu.vector_store %arg4[%c0_3, %c0_4], %3 {strides = array<i32>} : memref<2x1024xf32, #tpu.memory_space<vmem>>, vector<2x1024xf32>,
    return
  }
  func.func @transform_0(%arg0: i32, %arg1: i32) -> (i32, i32) {
    %c0_i32 = arith.constant 0 : i32
    return %arg1, %arg0 : i32, i32
  }
  func.func @transform_1(%arg0: i32, %arg1: i32) -> (i32, i32) {
    %c0_i32 = arith.constant 0 : i32
    %c0_i32_0 = arith.constant 0 : i32
    return %c0_i32, %arg0 : i32, i32
  }
  func.func @transform_2(%arg0: i32, %arg1: i32) -> (i32, i32) {
    %c0_i32 = arith.constant 0 : i32
    return %arg1, %arg0 : i32, i32
  }
}

</mosaic_0001>

<llo_original>
// kernel: tpu_custom_call.1
$region0: #{tpu_custom_call.1}
  #allocation0 [shape = 'u32[]', space=smem, size = 0x4, offset = 0x4, fixed_abs, tag = 'smem constant byte address 0x4 - core index']
  #allocation1 [shape = 'u32[72,128]{1,0:T(1,128)}', space=vmem, size = 0x9000, scoped, tag = 'internal scratch']
  %s0 = inlined_call_operand.hbm [shape: f32[2,1024], index: 0, kind: input, shape index: {}]
  %s1 = inlined_call_operand.hbm [shape: f32[1,1024], index: 1, kind: input, shape index: {}]
  %s2 = inlined_call_operand.hbm [shape: f32[2,1024], index: 2, kind: output, shape index: {}]
  %s3 = sld [smem:[#allocation0]]
  $region26: #{tpu_custom_call.1} parent=0
    _
  %s5 = ssub.s32 1, %s3
  %s6 = scalar_select 0, %s5, %s3
  $region1: #{tpu_custom_call.1} parent=0
    #allocation2 [shape = 'u8[8192]{0}', space=vmem, size = 0x2000, scoped, tag = 'input window, operand 0, single buffered']
    #allocation3 [shape = 's32[1]{0}', space=sflag, size = 0x4, scoped, tag = 'scoped memory for tpu_custom_call.1']
    #allocation4 [shape = 's32[1]{0}', space=sflag, size = 0x4, scoped, tag = 'scoped memory for tpu_custom_call.1']
    #allocation5 [shape = 'u8[4096]{0}', space=vmem, size = 0x1000, scoped, tag = 'input window, operand 1, single buffered']
    #allocation6 [shape = 's32[1]{0}', space=sflag, size = 0x4, scoped, tag = 'scoped memory for tpu_custom_call.1']
    #allocation7 [shape = 'u8[8192]{0}', space=vmem, size = 0x2000, scoped, tag = 'output window, operand 0, single buffered']
    %7 = vsyncpa [#allocation3], 0
    %8 = vsyncpa [#allocation6], 0
    %9 = vsyncpa [#allocation4], 0
    // Predicated region
    $region2: #{tpu_custom_call.1} parent=1 // pred_check
      _
    $region3: #{tpu_custom_call.1} parent=1 // pred_check_branch
      %11 = sbr.rel (0) target = $region5
    $region4: #{tpu_custom_call.1} parent=1 // pred_region
      %13 = vsyncadd [#allocation3], 0
      %s15 = sshll.u32 %s0, 4
      %s16 = int_to_ptr.hbm [resolvable:$true] %s15
      %s17 = sshll.u32 [#allocation2], 4
      %s18 = int_to_ptr.vmem [resolvable:$true] %s17
      %20 = dma.hbm_to_vmem [thread:$0]  %s16, 256, %s18, [#allocation3]
    $region5: #{tpu_custom_call.1} parent=1 // pred_fallthru
      _
    // Predicated region
    $region6: #{tpu_custom_call.1} parent=1 // pred_check
      _
    $region7: #{tpu_custom_call.1} parent=1 // pred_check_branch
      %22 = sbr.rel (0) target = $region9
    $region8: #{tpu_custom_call.1} parent=1 // pred_region
      %24 = vsyncadd [#allocation6], 0
      %s26 = sshll.u32 %s1, 4
      %s27 = int_to_ptr.hbm [resolvable:$true] %s26
      %s28 = sshll.u32 [#allocation5], 4
      %s29 = int_to_ptr.vmem [resolvable:$true] %s28
      %31 = dma.hbm_to_vmem [thread:$0]  %s27, 128, %s29, [#allocation6]
    $region9: #{tpu_custom_call.1} parent=1 // pred_fallthru
      _
    // Predicated region
    $region10: #{tpu_custom_call.1} parent=1 // pred_check
      _
    $region11: #{tpu_custom_call.1} parent=1 // pred_check_branch
      %33 = sbr.rel (0) target = $region13
    $region12: #{tpu_custom_call.1} parent=1 // pred_region
      %35 = dma.done [#allocation3], 256
    $region13: #{tpu_custom_call.1} parent=1 // pred_fallthru
      _
    // Predicated region
    $region14: #{tpu_custom_call.1} parent=1 // pred_check
      _
    $region15: #{tpu_custom_call.1} parent=1 // pred_check_branch
      %37 = sbr.rel (0) target = $region17
    $region16: #{tpu_custom_call.1} parent=1 // pred_region
      %39 = dma.done [#allocation6], 128
    $region17: #{tpu_custom_call.1} parent=1 // pred_fallthru
      _
    %v40 = vld [vmem:[#allocation2] sm:$0xff]
    %v41 = vld [vmem:[#allocation2 + $0x8] sm:$0xff]
    %v42 = vld [vmem:[#allocation5] sm:$0xff]
    %v44 = vperm.slane %v42, 0
    %v45 = vperm.slane %v42, 1
    %v46 = vperm.slane %v42, 2
    %v47 = vperm.slane %v42, 3
    %v48 = vperm.slane %v42, 4
    %v49 = vperm.slane %v42, 5
    %v50 = vperm.slane %v42, 6
    %v51 = vperm.slane %v42, 7
    %v52 = vrot.slane %v45, 6
    %v53 = vrot.slane %v46, 4
    %v54 = vrot.slane %v47, 2
    %v55 = vrot.slane %v49, 6
    %v56 = vrot.slane %v50, 4
    %v57 = vrot.slane %v51, 2
    %vm58 = vcmask 1041408
    %v59 = vsel %vm58, %v44, %v52
    %vm60 = vcmask 1045508
    %v61 = vsel %vm60, %v53, %v54
    %vm62 = vcmask 1043456
    %v63 = vsel %vm62, %v59, %v61
    %v64 = vsel %vm58, %v48, %v55
    %v65 = vsel %vm60, %v56, %v57
    %v66 = vsel %vm62, %v64, %v65
    %v69 = vmul.f32 %v40, %v63
    %v70 = vmul.f32 %v41, %v66
    %71 = vst [vmem:[#allocation7] sm:$0xff] %v69
    %72 = vst [vmem:[#allocation7 + $0x8] sm:$0xff] %v70
    // Predicated region
    $region18: #{tpu_custom_call.1} parent=1 // pred_check
      _
    $region19: #{tpu_custom_call.1} parent=1 // pred_check_branch
      %74 = sbr.rel (0) target = $region21
    $region20: #{tpu_custom_call.1} parent=1 // pred_region
      %76 = vsyncadd [#allocation4], 0
      %s78 = sshll.u32 [#allocation7], 4
      %s79 = int_to_ptr.vmem [resolvable:$true] %s78
      %s80 = sshll.u32 %s2, 4
      %s81 = int_to_ptr.hbm [resolvable:$true] %s80
      %83 = dma.vmem_to_hbm [thread:$0]  %s79, 256, %s81, [#allocation4]
    $region21: #{tpu_custom_call.1} parent=1 // pred_fallthru
      _
    // Predicated region
    $region22: #{tpu_custom_call.1} parent=1 // pred_check
      _
    $region23: #{tpu_custom_call.1} parent=1 // pred_check_branch
      %85 = sbr.rel (0) target = $region25
    $region24: #{tpu_custom_call.1} parent=1 // pred_region
      %87 = dma.done [#allocation4], 256
    $region25: #{tpu_custom_call.1} parent=1 // pred_fallthru
      _
    %88 = vsyncpa [#allocation3], 1
    %89 = vsyncpa [#allocation6], 1
    %90 = vsyncpa [#allocation4], 1

</llo_original>
